<compile_context>
chip_gen: v7x
topology: tpu7x:2x2x1
jax: 0.10.0
libtpu: 0.0.40
codegen_flags: <defaults>
</compile_context>

<pallas_src>
import functools

import jax
import jax.numpy as jnp
from jax.experimental import pallas as pl
from jax.experimental.pallas import tpu as pltpu


def _round_up(a, b):
    return (a + b - 1) // b * b


def _choose_row_tile(n_rows):
    # Large tiles amortize the ~0.35 us per-grid-step overhead and give the
    # MXU a big M dimension, but keep >= 2 grid steps so the "parallel" axis
    # can split across v7x's two TensorCores.
    for tp in (1024, 512, 256, 128):
        if n_rows >= 2 * tp:
            return tp
    # Small-N fallback: a single grid step; multiple of 16 matches bf16
    # sublane packing (16 rows per packed vreg).
    return _round_up(n_rows, 16)


def _vmem_budget(tp, d, h1, h2, n_cls_p):
    io = (2 * tp * d * 4                       # x tile (f32), double-buffered
          + 2 * tp * 128 * 4                   # packed BN params (lane-padded)
          + 2 * tp * n_cls_p * 2               # bf16 output tile, double-buffered
          + (d * h1 + h1 * h2 + h2 * n_cls_p) * 2   # bf16 weights, single-buffered
          + 8 * (h1 + h2 + n_cls_p) * 4)       # biases (sublane-padded)
    scratch = tp * (h1 + h2) * 4 + tp * h1 * 2  # f32 intermediates + bf16 recasts
    budget = 2 * (io + scratch)                # 2x headroom for compiler temporaries
    return int(min(max(budget, 16 * 1024 * 1024), 64 * 1024 * 1024))


def _decoder_mlp_kernel(x_ref, bn_ref, w1_ref, b1_ref, w2_ref, b2_ref,
                        w3_ref, b3_ref, o_ref):
    # x block: (TP, D) f32 in HBM/VMEM; cast to bf16 here (MXU operand),
    # avoiding a separate wrapper-side cast pass over x.
    x = x_ref[...].astype(jnp.bfloat16)

    # Packed per-row BN affine params: columns [s1, t1, s2, t2]; static
    # column slices are free.
    bn = bn_ref[...]                                   # (TP, 4) f32
    s1, t1 = bn[:, 0:1], bn[:, 1:2]
    s2, t2 = bn[:, 2:3], bn[:, 3:4]

    # Linear(d_encoder, 512): bf16 x bf16 -> f32 accumulate on the MXU.
    h = jnp.dot(x, w1_ref[...], preferred_element_type=jnp.float32) + b1_ref[...]
    # BatchNorm1d(P) eval affine (per-row scale/shift, bcast over feats) + ReLU.
    h = jnp.maximum(h * s1 + t1, 0.0)                  # Dropout(0.2) identity (eval)

    # Linear(512, 256)
    h = jnp.dot(h.astype(jnp.bfloat16), w2_ref[...],
                preferred_element_type=jnp.float32) + b2_ref[...]
    h = jnp.maximum(h * s2 + t2, 0.0)                  # Dropout(0.1) identity (eval)

    # Linear(256, n_classes_padded) -> lane-dense bf16 output store.
    y = jnp.dot(h.astype(jnp.bfloat16), w3_ref[...],
                preferred_element_type=jnp.float32) + b3_ref[...]
    o_ref[...] = y.astype(o_ref.dtype)


def decoder_mlp_forward(x, params, *, image_size, patch_size):
    """x: (B, P, D_enc) float32  ->  (B, n_classes, GS, GS) float32."""
    B, P, D = x.shape
    w1, b1, s1, t1, w2, b2, s2, t2, w3, b3 = params
    H1 = w1.shape[1]           # 512
    H2 = w2.shape[1]           # 256
    n_cls = w3.shape[1]
    GS = image_size[0] // patch_size
    assert P == GS * GS

    # ---- layout plumbing (plain JAX) -------------------------------------
    N = B * P                                  # flatten batch into token axis
    TP = _choose_row_tile(N)
    N_pad = _round_up(N, TP)
    n_cls_p = _round_up(n_cls, 128)            # lane-dense output width

    x2 = x.reshape(N, D)                       # stays f32 (cast in-kernel)

    # Pack the four per-row BN params into one (N, 4) array -> one DMA/step.
    bn = jnp.stack([jnp.tile(s1, B), jnp.tile(t1, B),
                    jnp.tile(s2, B), jnp.tile(t2, B)], axis=1).astype(jnp.float32)

    if N_pad != N:
        x2 = jnp.pad(x2, ((0, N_pad - N), (0, 0)))
        bn = jnp.pad(bn, ((0, N_pad - N), (0, 0)))

    w1b = w1.astype(jnp.bfloat16)
    w2b = w2.astype(jnp.bfloat16)
    w3b = jnp.pad(w3, ((0, 0), (0, n_cls_p - n_cls))).astype(jnp.bfloat16)
    b1_2d = b1.reshape(1, H1)
    b2_2d = b2.reshape(1, H2)
    b3_2d = jnp.pad(b3, (0, n_cls_p - n_cls)).reshape(1, n_cls_p)

    # ---- pallas call ------------------------------------------------------
    grid = (N_pad // TP,)
    row = lambda shape: pl.BlockSpec(shape, lambda r: (r, 0))
    # Constant-index operands only need a single buffer (fetched once).
    const = lambda shape: pl.BlockSpec(shape, lambda r: tuple(0 for _ in shape),
                                       pipeline_mode=pl.Buffered(1))

    flops = 2 * N_pad * (D * H1 + H1 * H2 + H2 * n_cls_p)
    bytes_accessed = (x2.size * 4 + bn.size * 4
                      + (w1b.size + w2b.size + w3b.size) * 2
                      + (b1_2d.size + b2_2d.size + b3_2d.size) * 4
                      + N_pad * n_cls_p * 2)            # bf16 output

    out_flat = pl.pallas_call(
        _decoder_mlp_kernel,
        out_shape=jax.ShapeDtypeStruct((N_pad, n_cls_p), jnp.bfloat16),
        grid_spec=pltpu.PrefetchScalarGridSpec(
            num_scalar_prefetch=0,
            grid=grid,
            in_specs=[
                row((TP, D)),                                   # x tile (f32)
                row((TP, 4)),                                   # packed s1/t1/s2/t2
                const((D, H1)), const((1, H1)),                 # w1, b1
                const((H1, H2)), const((1, H2)),                # w2, b2
                const((H2, n_cls_p)), const((1, n_cls_p)),      # w3, b3 (padded)
            ],
            # If profiling on v6e still shows exposed x/out DMA, sweep
            # pipeline_mode=pl.Buffered(3) on these two specs (kept at the
            # default 2 here: no measured win assumed).
            out_specs=row((TP, n_cls_p)),
        ),
        compiler_params=pltpu.CompilerParams(
            dimension_semantics=("parallel",),
            vmem_limit_bytes=_vmem_budget(TP, D, H1, H2, n_cls_p)),
        cost_estimate=pl.CostEstimate(
            flops=flops, transcendentals=0, bytes_accessed=bytes_accessed),
    )(x2, bn, w1b, b1_2d, w2b, b2_2d, w3b, b3_2d)

    # drop row/class padding, rearrange 'b (h w) c -> b c h w', cast back to f32
    out = out_flat[:N, :n_cls].reshape(B, GS, GS, n_cls)
    return out.transpose(0, 3, 1, 2).astype(jnp.float32)


def _reference_forward(x, params, *, image_size, patch_size):
    """Pure-JAX (f32) reference of the same eval-mode forward."""
    B, P, D = x.shape
    w1, b1, s1, t1, w2, b2, s2, t2, w3, b3 = params
    GS = image_size[0] // patch_size
    h = x @ w1 + b1
    h = h * s1[None, :, None] + t1[None, :, None]
    h = jnp.maximum(h, 0.0)
    h = h @ w2 + b2
    h = h * s2[None, :, None] + t2[None, :, None]
    h = jnp.maximum(h, 0.0)
    y = h @ w3 + b3
    return y.reshape(B, GS, GS, -1).transpose(0, 3, 1, 2)


def make_params(key, d_encoder, num_patches, n_classes, eps=1e-5):
    ks = jax.random.split(key, 10)
    H1, H2 = 512, 256
    w1 = jax.random.normal(ks[0], (d_encoder, H1), jnp.float32) * 0.05
    b1 = jax.random.normal(ks[1], (H1,), jnp.float32) * 0.05
    w2 = jax.random.normal(ks[2], (H1, H2), jnp.float32) * 0.05
    b2 = jax.random.normal(ks[3], (H2,), jnp.float32) * 0.05
    w3 = jax.random.normal(ks[4], (H2, n_classes), jnp.float32) * 0.05
    b3 = jax.random.normal(ks[5], (n_classes,), jnp.float32) * 0.05
    # BatchNorm1d(num_patches) params; running stats at their PyTorch defaults.
    gamma1 = 1.0 + 0.1 * jax.random.normal(ks[6], (num_patches,), jnp.float32)
    beta1 = 0.1 * jax.random.normal(ks[7], (num_patches,), jnp.float32)
    gamma2 = 1.0 + 0.1 * jax.random.normal(ks[8], (num_patches,), jnp.float32)
    beta2 = 0.1 * jax.random.normal(ks[9], (num_patches,), jnp.float32)
    run_mean = jnp.zeros((num_patches,), jnp.float32)
    run_var = jnp.ones((num_patches,), jnp.float32)
    # Fold eval-mode BN into per-patch scale/shift.
    s1 = gamma1 / jnp.sqrt(run_var + eps)
    t1 = beta1 - run_mean * s1
    s2 = gamma2 / jnp.sqrt(run_var + eps)
    t2 = beta2 - run_mean * s2
    return (w1, b1, s1, t1, w2, b2, s2, t2, w3, b3)


if __name__ == "__main__":
    # Small, forward-consistent shapes.
    batch = 2
    n_classes = 4
    d_encoder = 32
    patch_size = 16
    image_size = (64, 64)
    GS = image_size[0] // patch_size            # 4
    num_patches = GS * GS                       # 16

    key = jax.random.PRNGKey(0)
    k_x, k_p = jax.random.split(key)
    x = jax.random.normal(k_x, (batch, num_patches, d_encoder), jnp.float32)
    params = make_params(k_p, d_encoder, num_patches, n_classes)

    fwd = jax.jit(functools.partial(
        decoder_mlp_forward, image_size=image_size, patch_size=patch_size))
    out = fwd(x, params)
    jax.block_until_ready(out)

    ref = _reference_forward(x, params, image_size=image_size, patch_size=patch_size)
    assert out.shape == (batch, n_classes, GS, GS), out.shape
    # bf16 matmul operands + bf16 output store with f32 accumulation
    # -> relaxed tolerance vs f32 reference.
    assert jnp.allclose(out, ref, atol=4e-2, rtol=4e-2), float(
        jnp.max(jnp.abs(out - ref)))

    print("KERNEL_OK")
</pallas_src>

<mosaic_0001>
module attributes {stable_mosaic.version = 11 : i64} {
  func.func @_decoder_mlp_kernel(%arg0: i32, %arg1: memref<32x32xf32, #tpu.memory_space<vmem>>, %arg2: memref<32x4xf32, #tpu.memory_space<vmem>>, %arg3: memref<32x512xbf16, #tpu.memory_space<vmem>>, %arg4: memref<1x512xf32, #tpu.memory_space<vmem>>, %arg5: memref<512x256xbf16, #tpu.memory_space<vmem>>, %arg6: memref<1x256xf32, #tpu.memory_space<vmem>>, %arg7: memref<256x128xbf16, #tpu.memory_space<vmem>>, %arg8: memref<1x128xf32, #tpu.memory_space<vmem>>, %arg9: memref<32x128xbf16, #tpu.memory_space<vmem>>) attributes {dimension_semantics = [#tpu.dimension_semantics<parallel>], iteration_bounds = array<i64: 1>, scalar_prefetch = 0 : i64, scratch_operands = 0 : i64, tpu.core_type = #tpu.core_type<tc>, window_params = [{transform_indices = @transform_0, window_bounds = array<i64: 32, 32>}, {transform_indices = @transform_1, window_bounds = array<i64: 32, 4>}, {pipeline_mode = #tpu.pipeline_mode<synchronous>, transform_indices = @transform_2, window_bounds = array<i64: 32, 512>}, {pipeline_mode = #tpu.pipeline_mode<synchronous>, transform_indices = @transform_3, window_bounds = array<i64: 1, 512>}, {pipeline_mode = #tpu.pipeline_mode<synchronous>, transform_indices = @transform_4, window_bounds = array<i64: 512, 256>}, {pipeline_mode = #tpu.pipeline_mode<synchronous>, transform_indices = @transform_5, window_bounds = array<i64: 1, 256>}, {pipeline_mode = #tpu.pipeline_mode<synchronous>, transform_indices = @transform_6, window_bounds = array<i64: 256, 128>}, {pipeline_mode = #tpu.pipeline_mode<synchronous>, transform_indices = @transform_7, window_bounds = array<i64: 1, 128>}, {transform_indices = @transform_8, window_bounds = array<i64: 32, 128>}]} {
    %c0 = arith.constant 0 : index
    %c0_0 = arith.constant 0 : index
    %0 = vector.load %arg1[%c0, %c0_0] : memref<32x32xf32, #tpu.memory_space<vmem>>, vector<32x32xf32>
    %1 = arith.truncf %0 : vector<32x32xf32> to vector<32x32xbf16>
    %c0_1 = arith.constant 0 : index
    %c0_2 = arith.constant 0 : index
    %2 = vector.load %arg2[%c0_1, %c0_2] : memref<32x4xf32, #tpu.memory_space<vmem>>, vector<32x4xf32>
    %3 = vector.extract_strided_slice %2 {offsets = [0, 0], sizes = [32, 1], strides = [1, 1]} : vector<32x4xf32> to vector<32x1xf32>
    %4 = vector.extract_strided_slice %2 {offsets = [0, 1], sizes = [32, 1], strides = [1, 1]} : vector<32x4xf32> to vector<32x1xf32>
    %5 = vector.extract_strided_slice %2 {offsets = [0, 2], sizes = [32, 1], strides = [1, 1]} : vector<32x4xf32> to vector<32x1xf32>
    %6 = vector.extract_strided_slice %2 {offsets = [0, 3], sizes = [32, 1], strides = [1, 1]} : vector<32x4xf32> to vector<32x1xf32>
    %c0_3 = arith.constant 0 : index
    %c0_4 = arith.constant 0 : index
    %7 = vector.load %arg3[%c0_3, %c0_4] : memref<32x512xbf16, #tpu.memory_space<vmem>>, vector<32x512xbf16>
    %cst = arith.constant dense<0.000000e+00> : vector<32x512xf32>
    %8 = tpu.matmul %1, %7, %cst {dimension_numbers = #tpu.dot_dimension_numbers<[1], [0], [0], [1], [0, 0, 1, 1], [], []>} : vector<32x32xbf16>, vector<32x512xbf16>, vector<32x512xf32> -> vector<32x512xf32>
    %c0_5 = arith.constant 0 : index
    %c0_6 = arith.constant 0 : index
    %9 = vector.load %arg4[%c0_5, %c0_6] : memref<1x512xf32, #tpu.memory_space<vmem>>, vector<1x512xf32>
    %10 = vector.broadcast %9 : vector<1x512xf32> to vector<32x512xf32>
    %11 = arith.addf %8, %10 : vector<32x512xf32>
    %12 = vector.broadcast %3 : vector<32x1xf32> to vector<32x512xf32>
    %13 = arith.mulf %11, %12 : vector<32x512xf32>
    %14 = vector.broadcast %4 : vector<32x1xf32> to vector<32x512xf32>
    %15 = arith.addf %13, %14 : vector<32x512xf32>
    %cst_7 = arith.constant 0.000000e+00 : f32
    %16 = vector.broadcast %cst_7 : f32 to vector<32x512xf32>
    %17 = arith.maximumf %15, %16 : vector<32x512xf32>
    %18 = arith.truncf %17 : vector<32x512xf32> to vector<32x512xbf16>
    %c0_8 = arith.constant 0 : index
    %c0_9 = arith.constant 0 : index
    %19 = vector.load %arg5[%c0_8, %c0_9] : memref<512x256xbf16, #tpu.memory_space<vmem>>, vector<512x256xbf16>
    %cst_10 = arith.constant dense<0.000000e+00> : vector<32x256xf32>
    %20 = tpu.matmul %18, %19, %cst_10 {dimension_numbers = #tpu.dot_dimension_numbers<[1], [0], [0], [1], [0, 0, 1, 1], [], []>} : vector<32x512xbf16>, vector<512x256xbf16>, vector<32x256xf32> -> vector<32x256xf32>
    %c0_11 = arith.constant 0 : index
    %c0_12 = arith.constant 0 : index
    %21 = vector.load %arg6[%c0_11, %c0_12] : memref<1x256xf32, #tpu.memory_space<vmem>>, vector<1x256xf32>
    %22 = vector.broadcast %21 : vector<1x256xf32> to vector<32x256xf32>
    %23 = arith.addf %20, %22 : vector<32x256xf32>
    %24 = vector.broadcast %5 : vector<32x1xf32> to vector<32x256xf32>
    %25 = arith.mulf %23, %24 : vector<32x256xf32>
    %26 = vector.broadcast %6 : vector<32x1xf32> to vector<32x256xf32>
    %27 = arith.addf %25, %26 : vector<32x256xf32>
    %cst_13 = arith.constant 0.000000e+00 : f32
    %28 = vector.broadcast %cst_13 : f32 to vector<32x256xf32>
    %29 = arith.maximumf %27, %28 : vector<32x256xf32>
    %30 = arith.truncf %29 : vector<32x256xf32> to vector<32x256xbf16>
    %c0_14 = arith.constant 0 : index
    %c0_15 = arith.constant 0 : index
    %31 = vector.load %arg7[%c0_14, %c0_15] : memref<256x128xbf16, #tpu.memory_space<vmem>>, vector<256x128xbf16>
    %cst_16 = arith.constant dense<0.000000e+00> : vector<32x128xf32>
    %32 = tpu.matmul %30, %31, %cst_16 {dimension_numbers = #tpu.dot_dimension_numbers<[1], [0], [0], [1], [0, 0, 1, 1], [], []>} : vector<32x256xbf16>, vector<256x128xbf16>, vector<32x128xf32> -> vector<32x128xf32>
    %c0_17 = arith.constant 0 : index
    %c0_18 = arith.constant 0 : index
    %33 = vector.load %arg8[%c0_17, %c0_18] : memref<1x128xf32, #tpu.memory_space<vmem>>, vector<1x128xf32>
    %34 = vector.broadcast %33 : vector<1x128xf32> to vector<32x128xf32>
    %35 = arith.addf %32, %34 : vector<32x128xf32>
    %36 = arith.truncf %35 : vector<32x128xf32> to vector<32x128xbf16>
    %c0_19 = arith.constant 0 : index
    %c0_20 = arith.constant 0 : index
    %37 = vector.load %arg9[%c0_19, %c0_20] : memref<32x128xbf16, #tpu.memory_space<vmem>>, vector<32x128xbf16>
    tpu.vector_store %arg9[%c0_19, %c0_20], %36 {strides = array<i32>} : memref<32x128xbf16, #tpu.memory_space<vmem>>, vector<32x128xbf16>,
    return
  }
  func.func @transform_0(%arg0: i32) -> (i32, i32) {
    %c0_i32 = arith.constant 0 : i32
    %c0_i32_0 = arith.constant 0 : i32
    return %arg0, %c0_i32 : i32, i32
  }
  func.func @transform_1(%arg0: i32) -> (i32, i32) {
    %c0_i32 = arith.constant 0 : i32
    %c0_i32_0 = arith.constant 0 : i32
    return %arg0, %c0_i32 : i32, i32
  }
  func.func @transform_2(%arg0: i32) -> (i32, i32) {
    %c0_i32 = arith.constant 0 : i32
    %c0_i32_0 = arith.constant 0 : i32
    %c0_i32_1 = arith.constant 0 : i32
    return %c0_i32, %c0_i32_0 : i32, i32
  }
  func.func @transform_3(%arg0: i32) -> (i32, i32) {
    %c0_i32 = arith.constant 0 : i32
    %c0_i32_0 = arith.constant 0 : i32
    %c0_i32_1 = arith.constant 0 : i32
    return %c0_i32, %c0_i32_0 : i32, i32
  }
  func.func @transform_4(%arg0: i32) -> (i32, i32) {
    %c0_i32 = arith.constant 0 : i32
    %c0_i32_0 = arith.constant 0 : i32
    %c0_i32_1 = arith.constant 0 : i32
    return %c0_i32, %c0_i32_0 : i32, i32
  }
  func.func @transform_5(%arg0: i32) -> (i32, i32) {
    %c0_i32 = arith.constant 0 : i32
    %c0_i32_0 = arith.constant 0 : i32
    %c0_i32_1 = arith.constant 0 : i32
    return %c0_i32, %c0_i32_0 : i32, i32
  }
  func.func @transform_6(%arg0: i32) -> (i32, i32) {
    %c0_i32 = arith.constant 0 : i32
    %c0_i32_0 = arith.constant 0 : i32
    %c0_i32_1 = arith.constant 0 : i32
    return %c0_i32, %c0_i32_0 : i32, i32
  }
  func.func @transform_7(%arg0: i32) -> (i32, i32) {
    %c0_i32 = arith.constant 0 : i32
    %c0_i32_0 = arith.constant 0 : i32
    %c0_i32_1 = arith.constant 0 : i32
    return %c0_i32, %c0_i32_0 : i32, i32
  }
  func.func @transform_8(%arg0: i32) -> (i32, i32) {
    %c0_i32 = arith.constant 0 : i32
    %c0_i32_0 = arith.constant 0 : i32
    return %arg0, %c0_i32 : i32, i32
  }
}

</mosaic_0001>

<llo_original>
// kernel: tile.23
$region0: #{tile.23}
  #allocation0 [shape = 's32[1]{0}', space=sflag, size = 0x4, scoped, tag = 'scoped memory for tile.23']
  %s0 = inlined_call_operand.vmem [shape: f32[16], index: 0, kind: input, shape index: {}]
  %s1 = inlined_call_operand.vmem [shape: f32[2,16], index: 1, kind: output, shape index: {}]
  // Predicated region
  $region2: #{tile.23} parent=0 // pred_check
    _
  $region3: #{tile.23} parent=0 // pred_check_branch
    %3 = sbr.rel (0) target = $region5
  $region4: #{tile.23} parent=0 // pred_region
    _
  $region5: #{tile.23} parent=0 // pred_fallthru
    _
  %v4 = vld [vmem:[%s0] ss:$0 sm:$0xff]
  %5 = vst [vmem:[%s1] sm:$0x3] %v4

// kernel: tile.36
$region0: #{tile.36}
  %s0 = inlined_call_operand.vmem [shape: f32[2,16], index: 0, kind: input, shape index: {}]
  %s1 = inlined_call_operand.vmem [shape: f32[32,1], index: 1, kind: output, shape index: {}]
  $region1: #{tile.36} parent=0
    #allocation0 [shape = 'u8[4096]{0}', space=vmem, size = 0x1000, scoped, tag = 'scoped mem for output reshape']
    #allocation1 [shape = 'u8[4096]{0}', space=vmem, size = 0x1000, scoped, tag = 'scoped mem for input reshape']
    %s3 = sshllo.u32 0, 2
    %v4 = vld [vmem:[%s0] sm:%s3]
    %5 = vst [vmem:[#allocation1] sm:%s3] %v4
    %v6 = vld [vmem:[#allocation1] sm:$0x1]
    %vm7 = vcmask 130048
    %8 = vst.msk [vmem:[#allocation0] sm:$0x1] %vm7, %v6
    %s9 = scalar_lea.vmem [#allocation1], 1
    %v10 = vld [vmem:[%s9] sm:$0x1]
    %11 = vrot.lane.b32.xlu0 %v10, 16
    %v12 = vpop.permute.xlu0 %11
    %vm13 = vcmask 261248
    %14 = vst.msk [vmem:[#allocation0] sm:$0x1] %vm13, %v12
    %s16 = sshllo.u32 0, 1
    %v18 = vld [vmem:[#allocation0] sm:%s16]
    %s19 = sshllo.u32 0, 1
    %20 = vst [vmem:[%s1] sm:%s19] %v18

// kernel: decoder_mlp_forward.1
$region0: #{decoder_mlp_forward.1}
  #allocation0 [shape = 'u32[]', space=smem, size = 0x4, offset = 0x4, fixed_abs, tag = 'smem constant byte address 0x4 - core index']
  #allocation1 [shape = 'u32[144,128]{1,0:T(1,128)}', space=vmem, size = 0x12000, scoped, tag = 'internal scratch']
  %s0 = inlined_call_operand.vmem [shape: f32[32,32], index: 0, kind: input, shape index: {}]
  %s1 = inlined_call_operand.vmem [shape: f32[32,4], index: 1, kind: input, shape index: {}]
  %s2 = inlined_call_operand.vmem [shape: bf16[32,512], index: 2, kind: input, shape index: {}]
  %s3 = inlined_call_operand.vmem [shape: f32[1,512], index: 3, kind: input, shape index: {}]
  %s4 = inlined_call_operand.vmem [shape: bf16[512,256], index: 4, kind: input, shape index: {}]
  %s5 = inlined_call_operand.vmem [shape: f32[1,256], index: 5, kind: input, shape index: {}]
  %s6 = inlined_call_operand.vmem [shape: bf16[256,128], index: 6, kind: input, shape index: {}]
  %s7 = inlined_call_operand.vmem [shape: f32[1,128], index: 7, kind: input, shape index: {}]
  %s8 = inlined_call_operand.vmem [shape: bf16[32,128], index: 8, kind: output, shape index: {}]
  %s9 = sld [smem:[#allocation0]]
  $region42: #{decoder_mlp_forward.1} parent=0
    _
  %s11 = ssub.s32 1, %s9
  %s12 = scalar_select 0, %s11, %s9
  // Predicated region
  $region2: #{decoder_mlp_forward.1} parent=0 // pred_check
    _
  $region3: #{decoder_mlp_forward.1} parent=0 // pred_check_branch
    %14 = sbr.rel (0) target = $region5
  $region4: #{decoder_mlp_forward.1} parent=0 // pred_region
    _
  $region5: #{decoder_mlp_forward.1} parent=0 // pred_fallthru
    _
  // Predicated region
  $region6: #{decoder_mlp_forward.1} parent=0 // pred_check
    _
  $region7: #{decoder_mlp_forward.1} parent=0 // pred_check_branch
    %16 = sbr.rel (0) target = $region9
  $region8: #{decoder_mlp_forward.1} parent=0 // pred_region
    _
  $region9: #{decoder_mlp_forward.1} parent=0 // pred_fallthru
    _
  // Predicated region
  $region10: #{decoder_mlp_forward.1} parent=0 // pred_check
    _
  $region11: #{decoder_mlp_forward.1} parent=0 // pred_check_branch
    %18 = sbr.rel (0) target = $region13
  $region12: #{decoder_mlp_forward.1} parent=0 // pred_region
    _
  $region13: #{decoder_mlp_forward.1} parent=0 // pred_fallthru
    _
  // Predicated region
  $region14: #{decoder_mlp_forward.1} parent=0 // pred_check
    _
  $region15: #{decoder_mlp_forward.1} parent=0 // pred_check_branch
    %20 = sbr.rel (0) target = $region17
  $region16: #{decoder_mlp_forward.1} parent=0 // pred_region
    _
  $region17: #{decoder_mlp_forward.1} parent=0 // pred_fallthru
    _
  // Predicated region
  $region18: #{decoder_mlp_forward.1} parent=0 // pred_check
    _
  $region19: #{decoder_mlp_forward.1} parent=0 // pred_check_branch
    %22 = sbr.rel (0) target = $region21
  $region20: #{decoder_mlp_forward.1} parent=0 // pred_region
    _
  $region21: #{decoder_mlp_forward.1} parent=0 // pred_fallthru
    _
  // Predicated region
  $region22: #{decoder_mlp_forward.1} parent=0 // pred_check
    _
  $region23: #{decoder_mlp_forward.1} parent=0 // pred_check_branch
    %24 = sbr.rel (0) target = $region25
  $region24: #{decoder_mlp_forward.1} parent=0 // pred_region
    _
  $region25: #{decoder_mlp_forward.1} parent=0 // pred_fallthru
    _
  // Predicated region
  $region26: #{decoder_mlp_forward.1} parent=0 // pred_check
    _
  $region27: #{decoder_mlp_forward.1} parent=0 // pred_check_branch
    %26 = sbr.rel (0) target = $region29
  $region28: #{decoder_mlp_forward.1} parent=0 // pred_region
    _
  $region29: #{decoder_mlp_forward.1} parent=0 // pred_fallthru
    _
  // Predicated region
  $region30: #{decoder_mlp_forward.1} parent=0 // pred_check
    _
  $region31: #{decoder_mlp_forward.1} parent=0 // pred_check_branch
    %28 = sbr.rel (0) target = $region33
  $region32: #{decoder_mlp_forward.1} parent=0 // pred_region
    _
  $region33: #{decoder_mlp_forward.1} parent=0 // pred_fallthru
    _
  %v30 = vld [vmem:[%s0] sm:$0xff]
  %v31 = vld [vmem:[%s0 + $0x8] sm:$0xff]
  %v32 = vld [vmem:[%s0 + $0x10] sm:$0xff]
  %v33 = vld [vmem:[%s0 + $0x18] sm:$0xff]
  %v34 = vpack.c.bf16 %v31, %v30
  %v35 = vpack.c.bf16 %v33, %v32
  %v36 = vld [vmem:[%s1] sm:$0xff]
  %v37 = vld [vmem:[%s1 + $0x8] sm:$0xff]
  %v38 = vld [vmem:[%s1 + $0x10] sm:$0xff]
  %v39 = vld [vmem:[%s1 + $0x18] sm:$0xff]
  %v40 = vld [vmem:[%s2] sm:$0xff]
  %v41 = vld [vmem:[%s2 + $0x8] sm:$0xff]
  %v42 = vld [vmem:[%s2 + $0x10] sm:$0xff]
  %v43 = vld [vmem:[%s2 + $0x18] sm:$0xff]
  %v44 = vld [vmem:[%s2 + $0x20] sm:$0xff]
  %v45 = vld [vmem:[%s2 + $0x28] sm:$0xff]
  %v46 = vld [vmem:[%s2 + $0x30] sm:$0xff]
  %v47 = vld [vmem:[%s2 + $0x38] sm:$0xff]
  %v48 = vld [vmem:[%s3] sm:$0xf]
  %v50 = vlaneseq
  %v51 = vshrl.u32 %v50, 7
  %v52 = vsub.s32 0, %v51
  %v53 = vrot.slane %v48, %v52
  %v54 = vlaneseq
  %v55 = vshrl.u32 %v54, 7
  %v56 = vsub.s32 1, %v55
  %v57 = vrot.slane %v48, %v56
  %v58 = vlaneseq
  %v59 = vshrl.u32 %v58, 7
  %v60 = vsub.s32 2, %v59
  %v61 = vrot.slane %v48, %v60
  %v62 = vlaneseq
  %v63 = vshrl.u32 %v62, 7
  %v64 = vsub.s32 3, %v63
  %v65 = vrot.slane %v48, %v64
  %v78 = vunpack.c.l.b16 %v40
  %v79 = vunpack.c.h.b16 %v40
  %v80 = vunpack.c.l.b16 %v41
  %v81 = vunpack.c.h.b16 %v41
  %v82 = vunpack.c.l.b16 %v42
  %v83 = vunpack.c.h.b16 %v42
  %v84 = vunpack.c.l.b16 %v43
  %v85 = vunpack.c.h.b16 %v43
  %v86 = vunpack.c.l.b16 %v44
  %v87 = vunpack.c.h.b16 %v44
  %v88 = vunpack.c.l.b16 %v45
  %v89 = vunpack.c.h.b16 %v45
  %v90 = vunpack.c.l.b16 %v46
  %v91 = vunpack.c.h.b16 %v46
  %v92 = vunpack.c.l.b16 %v47
  %v93 = vunpack.c.h.b16 %v47
  %v94 = vpack.c.b16 %v82, %v78
  %v95 = vpack.c.b16 %v83, %v79
  %v96 = vpack.c.b16 %v84, %v80
  %v97 = vpack.c.b16 %v85, %v81
  %v98 = vpack.c.b16 %v90, %v86
  %v99 = vpack.c.b16 %v91, %v87
  %v100 = vpack.c.b16 %v92, %v88
  %v101 = vpack.c.b16 %v93, %v89
  %vm110 = vcmask 261120
  %v112 = vsel %vm110, %v34, 0
  %v115 = vsel %vm110, %v35, 0
  %117 = vmatprep.subr.bf16.mxu0 %v95
  %118 = vmatpush1.bf16.msra.mxu0 %v94
  %119 = vmatprep.subr.bf16.mxu0 %v99
  %120 = vmatpush1.bf16.msra.mxu0 %v98
  %121 = vmatprep.subr.bf16.mxu0 0
  %122 = vmatpush1.bf16.msra.mxu0 0
  %123 = vmatprep.subr.bf16.mxu0 0
  %124 = vmatpush1.bf16.msra.mxu0 0
  %125 = vmatprep.subr.bf16.mxu0 0
  %126 = vmatpush1.bf16.msra.mxu0 0
  %127 = vmatprep.subr.bf16.mxu0 0
  %128 = vmatpush1.bf16.msra.mxu0 0
  %129 = vmatprep.subr.bf16.mxu0 0
  %130 = vmatpush1.bf16.msra.mxu0 0
  %131 = vmatprep.subr.bf16.mxu0 0
  %132 = vmatpush1.bf16.msra.mxu0 0
  %133 = vmatprep.subr.bf16.mxu0 0
  %134 = vmatpush1.bf16.msra.mxu0 0
  %135 = vmatprep.subr.bf16.mxu0 0
  %136 = vmatpush1.bf16.msra.mxu0 0
  %137 = vmatprep.subr.bf16.mxu0 0
  %138 = vmatpush1.bf16.msra.mxu0 0
  %139 = vmatprep.subr.bf16.mxu0 0
  %140 = vmatpush1.bf16.msra.mxu0 0
  %141 = vmatprep.subr.bf16.mxu0 0
  %142 = vmatpush1.bf16.msra.mxu0 0
  %143 = vmatprep.subr.bf16.mxu0 0
  %144 = vmatpush1.bf16.msra.mxu0 0
  %145 = vmatprep.subr.bf16.mxu0 0
  %146 = vmatpush1.bf16.msra.mxu0 0
  %147 = vmatprep.subr.bf16.mxu0 0
  %148 = vmatpush1.bf16.msra.mxu0 0
  %149 = vmatprep.mubr.bf16.mxu0 0
  %150 = vmatmul.mubr.bf16.gmra.mrb[0].mxu0 %v112
  %v151 = vpop.f32.mrb[0].mxu0
  %v152 = vadd.f32 %v53, %v151
  %v153 = vpop.f32.mrb[0].mxu0
  %v154 = vadd.f32 %v57, %v153
  %v155 = vpop.f32.mrb[0].mxu0
  %v156 = vadd.f32 %v53, %v155
  %v157 = vpop.f32.mrb[0].mxu0
  %v158 = vadd.f32 %v57, %v157
  %159 = vmatprep.mubr.bf16.mxu0 0
  %160 = vmatmul.mubr.bf16.gmra.mrb[0].mxu0 %v115
  %v161 = vpop.f32.mrb[0].mxu0
  %v162 = vadd.f32 %v53, %v161
  %v163 = vpop.f32.mrb[0].mxu0
  %v164 = vadd.f32 %v57, %v163
  %v165 = vpop.f32.mrb[0].mxu0
  %v166 = vadd.f32 %v53, %v165
  %v167 = vpop.f32.mrb[0].mxu0
  %v168 = vadd.f32 %v57, %v167
  %169 = vdwg.mxu0
  %170 = vmatprep.subr.bf16.mxu0 %v97
  %171 = vmatpush1.bf16.msra.mxu0 %v96
  %172 = vmatprep.subr.bf16.mxu0 %v101
  %173 = vmatpush1.bf16.msra.mxu0 %v100
  %174 = vmatprep.subr.bf16.mxu0 0
  %175 = vmatpush1.bf16.msra.mxu0 0
  %176 = vmatprep.subr.bf16.mxu0 0
  %177 = vmatpush1.bf16.msra.mxu0 0
  %178 = vmatprep.subr.bf16.mxu0 0
  %179 = vmatpush1.bf16.msra.mxu0 0
  %180 = vmatprep.subr.bf16.mxu0 0
  %181 = vmatpush1.bf16.msra.mxu0 0
  %182 = vmatprep.subr.bf16.mxu0 0
  %183 = vmatpush1.bf16.msra.mxu0 0
  %184 = vmatprep.subr.bf16.mxu0 0
  %185 = vmatpush1.bf16.msra.mxu0 0
  %186 = vmatprep.subr.bf16.mxu0 0
  %187 = vmatpush1.bf16.msra.mxu0 0
  %188 = vmatprep.subr.bf16.mxu0 0
  %189 = vmatpush1.bf16.msra.mxu0 0
  %190 = vmatprep.subr.bf16.mxu0 0
  %191 = vmatpush1.bf16.msra.mxu0 0
  %192 = vmatprep.subr.bf16.mxu0 0
  %193 = vmatpush1.bf16.msra.mxu0 0
  %194 = vmatprep.subr.bf16.mxu0 0
  %195 = vmatpush1.bf16.msra.mxu0 0
  %196 = vmatprep.subr.bf16.mxu0 0
  %197 = vmatpush1.bf16.msra.mxu0 0
  %198 = vmatprep.subr.bf16.mxu0 0
  %199 = vmatpush1.bf16.msra.mxu0 0
  %200 = vmatprep.subr.bf16.mxu0 0
  %201 = vmatpush1.bf16.msra.mxu0 0
  %202 = vmatprep.mubr.bf16.mxu0 0
  %203 = vmatmul.mubr.bf16.gmra.mrb[0].mxu0 %v112
  %v204 = vpop.f32.mrb[0].mxu0
  %v205 = vadd.f32 %v61, %v204
  %v206 = vpop.f32.mrb[0].mxu0
  %v207 = vadd.f32 %v65, %v206
  %v208 = vpop.f32.mrb[0].mxu0
  %v209 = vadd.f32 %v61, %v208
  %v210 = vpop.f32.mrb[0].mxu0
  %v211 = vadd.f32 %v65, %v210
  %212 = vmatprep.mubr.bf16.mxu0 0
  %213 = vmatmul.mubr.bf16.gmra.mrb[0].mxu0 %v115
  %v214 = vpop.f32.mrb[0].mxu0
  %v215 = vadd.f32 %v61, %v214
  %v216 = vpop.f32.mrb[0].mxu0
  %v217 = vadd.f32 %v65, %v216
  %v218 = vpop.f32.mrb[0].mxu0
  %v219 = vadd.f32 %v61, %v218
  %v220 = vpop.f32.mrb[0].mxu0
  %v221 = vadd.f32 %v65, %v220
  %222 = vdwg.mxu0
  %224 = vset.pattern.permute.xlu0 0
  %225 = vperm.xlu0 %224, %v36
  %v226 = vpop.permute.xlu0 %225
  %229 = vset.pattern.permute.xlu0 0
  %230 = vperm.xlu0 %229, %v37
  %v231 = vpop.permute.xlu0 %230
  %234 = vset.pattern.permute.xlu0 0
  %235 = vperm.xlu0 %234, %v38
  %v236 = vpop.permute.xlu0 %235
  %239 = vset.pattern.permute.xlu0 0
  %240 = vperm.xlu0 %239, %v39
  %v241 = vpop.permute.xlu0 %240
  %v243 = vmul.f32 %v152, %v226
  %v244 = vmul.f32 %v154, %v226
  %v245 = vmul.f32 %v205, %v226
  %v246 = vmul.f32 %v207, %v226
  %v247 = vmul.f32 %v156, %v231
  %v248 = vmul.f32 %v158, %v231
  %v249 = vmul.f32 %v209, %v231
  %v250 = vmul.f32 %v211, %v231
  %v251 = vmul.f32 %v162, %v236
  %v252 = vmul.f32 %v164, %v236
  %v253 = vmul.f32 %v215, %v236
  %v254 = vmul.f32 %v217, %v236
  %v255 = vmul.f32 %v166, %v241
  %v256 = vmul.f32 %v168, %v241
  %v257 = vmul.f32 %v219, %v241
  %v258 = vmul.f32 %v221, %v241
  %259 = vset.pattern.permute.xlu0 1
  %260 = vperm.xlu0 %259, %v36
  %v261 = vpop.permute.xlu0 %260
  %263 = vset.pattern.permute.xlu0 1
  %264 = vperm.xlu0 %263, %v37
  %v265 = vpop.permute.xlu0 %264
  %267 = vset.pattern.permute.xlu0 1
  %268 = vperm.xlu0 %267, %v38
  %v269 = vpop.permute.xlu0 %268
  %271 = vset.pattern.permute.xlu0 1
  %272 = vperm.xlu0 %271, %v39
  %v273 = vpop.permute.xlu0 %272
  %v275 = vadd.f32 %v243, %v261
  %v276 = vadd.f32 %v244, %v261
  %v277 = vadd.f32 %v245, %v261
  %v278 = vadd.f32 %v246, %v261
  %v279 = vadd.f32 %v247, %v265
  %v280 = vadd.f32 %v248, %v265
  %v281 = vadd.f32 %v249, %v265
  %v282 = vadd.f32 %v250, %v265
  %v283 = vadd.f32 %v251, %v269
  %v284 = vadd.f32 %v252, %v269
  %v285 = vadd.f32 %v253, %v269
  %v286 = vadd.f32 %v254, %v269
  %v287 = vadd.f32 %v255, %v273
  %v288 = vadd.f32 %v256, %v273
  %v289 = vadd.f32 %v257, %v273
  %v290 = vadd.f32 %v258, %v273
  %v291 = vmax.f32 %v275, 0.0
  %v292 = vmax.f32 %v276, 0.0
  %v293 = vmax.f32 %v277, 0.0
  %v294 = vmax.f32 %v278, 0.0
  %v295 = vmax.f32 %v279, 0.0
  %v296 = vmax.f32 %v280, 0.0
  %v297 = vmax.f32 %v281, 0.0
  %v298 = vmax.f32 %v282, 0.0
  %v299 = vmax.f32 %v283, 0.0
  %v300 = vmax.f32 %v284, 0.0
  %v301 = vmax.f32 %v285, 0.0
  %v302 = vmax.f32 %v286, 0.0
  %v303 = vmax.f32 %v287, 0.0
  %v304 = vmax.f32 %v288, 0.0
  %v305 = vmax.f32 %v289, 0.0
  %v306 = vmax.f32 %v290, 0.0
  %v307 = vpack.c.bf16 %v295, %v291
  %v308 = vpack.c.bf16 %v296, %v292
  %v309 = vpack.c.bf16 %v297, %v293
  %v310 = vpack.c.bf16 %v298, %v294
  %v311 = vpack.c.bf16 %v303, %v299
  %v312 = vpack.c.bf16 %v304, %v300
  %v313 = vpack.c.bf16 %v305, %v301
  %v314 = vpack.c.bf16 %v306, %v302
  %v315 = vld [vmem:[%s4] sm:$0xff]
  %v316 = vld [vmem:[%s4 + $0x8] sm:$0xff]
  %v317 = vld [vmem:[%s4 + $0x10] sm:$0xff]
  %v318 = vld [vmem:[%s4 + $0x18] sm:$0xff]
  %v319 = vld [vmem:[%s4 + $0x20] sm:$0xff]
  %v320 = vld [vmem:[%s4 + $0x28] sm:$0xff]
  %v321 = vld [vmem:[%s4 + $0x30] sm:$0xff]
  %v322 = vld [vmem:[%s4 + $0x38] sm:$0xff]
  %v323 = vld [vmem:[%s4 + $0x40] sm:$0xff]
  %v324 = vld [vmem:[%s4 + $0x48] sm:$0xff]
  %v325 = vld [vmem:[%s4 + $0x50] sm:$0xff]
  %v326 = vld [vmem:[%s4 + $0x58] sm:$0xff]
  %v327 = vld [vmem:[%s4 + $0x60] sm:$0xff]
  %v328 = vld [vmem:[%s4 + $0x68] sm:$0xff]
  %v329 = vld [vmem:[%s4 + $0x70] sm:$0xff]
  %v330 = vld [vmem:[%s4 + $0x78] sm:$0xff]
  %v331 = vld [vmem:[%s4 + $0x80] sm:$0xff]
  %v332 = vld [vmem:[%s4 + $0x88] sm:$0xff]
  %v333 = vld [vmem:[%s4 + $0x90] sm:$0xff]
  %v334 = vld [vmem:[%s4 + $0x98] sm:$0xff]
  %v335 = vld [vmem:[%s4 + $0xa0] sm:$0xff]
  %v336 = vld [vmem:[%s4 + $0xa8] sm:$0xff]
  %v337 = vld [vmem:[%s4 + $0xb0] sm:$0xff]
  %v338 = vld [vmem:[%s4 + $0xb8] sm:$0xff]
  %v339 = vld [vmem:[%s4 + $0xc0] sm:$0xff]
  %v340 = vld [vmem:[%s4 + $0xc8] sm:$0xff]
  %v341 = vld [vmem:[%s4 + $0xd0] sm:$0xff]
  %v342 = vld [vmem:[%s4 + $0xd8] sm:$0xff]
  %v343 = vld [vmem:[%s4 + $0xe0] sm:$0xff]
  %v344 = vld [vmem:[%s4 + $0xe8] sm:$0xff]
  %v345 = vld [vmem:[%s4 + $0xf0] sm:$0xff]
  %v346 = vld [vmem:[%s4 + $0xf8] sm:$0xff]
  %v347 = vld [vmem:[%s4 + $0x100] sm:$0xff]
  %v348 = vld [vmem:[%s4 + $0x108] sm:$0xff]
  %v349 = vld [vmem:[%s4 + $0x110] sm:$0xff]
  %v350 = vld [vmem:[%s4 + $0x118] sm:$0xff]
  %v351 = vld [vmem:[%s4 + $0x120] sm:$0xff]
  %v352 = vld [vmem:[%s4 + $0x128] sm:$0xff]
  %v353 = vld [vmem:[%s4 + $0x130] sm:$0xff]
  %v354 = vld [vmem:[%s4 + $0x138] sm:$0xff]
  %v355 = vld [vmem:[%s4 + $0x140] sm:$0xff]
  %v356 = vld [vmem:[%s4 + $0x148] sm:$0xff]
  %v357 = vld [vmem:[%s4 + $0x150] sm:$0xff]
  %v358 = vld [vmem:[%s4 + $0x158] sm:$0xff]
  %v359 = vld [vmem:[%s4 + $0x160] sm:$0xff]
  %v360 = vld [vmem:[%s4 + $0x168] sm:$0xff]
  %v361 = vld [vmem:[%s4 + $0x170] sm:$0xff]
  %v362 = vld [vmem:[%s4 + $0x178] sm:$0xff]
  %v363 = vld [vmem:[%s4 + $0x180] sm:$0xff]
  %v364 = vld [vmem:[%s4 + $0x188] sm:$0xff]
  %v365 = vld [vmem:[%s4 + $0x190] sm:$0xff]
  %v366 = vld [vmem:[%s4 + $0x198] sm:$0xff]
  %v367 = vld [vmem:[%s4 + $0x1a0] sm:$0xff]
  %v368 = vld [vmem:[%s4 + $0x1a8] sm:$0xff]
  %v369 = vld [vmem:[%s4 + $0x1b0] sm:$0xff]
  %v370 = vld [vmem:[%s4 + $0x1b8] sm:$0xff]
  %v371 = vld [vmem:[%s4 + $0x1c0] sm:$0xff]
  %v372 = vld [vmem:[%s4 + $0x1c8] sm:$0xff]
  %v373 = vld [vmem:[%s4 + $0x1d0] sm:$0xff]
  %v374 = vld [vmem:[%s4 + $0x1d8] sm:$0xff]
  %v375 = vld [vmem:[%s4 + $0x1e0] sm:$0xff]
  %v376 = vld [vmem:[%s4 + $0x1e8] sm:$0xff]
  %v377 = vld [vmem:[%s4 + $0x1f0] sm:$0xff]
  %v378 = vld [vmem:[%s4 + $0x1f8] sm:$0xff]
  %v379 = vld [vmem:[%s5] sm:$0x3]
  %v381 = vlaneseq
  %v382 = vshrl.u32 %v381, 7
  %v383 = vsub.s32 0, %v382
  %v384 = vrot.slane %v379, %v383
  %v385 = vlaneseq
  %v386 = vshrl.u32 %v385, 7
  %v387 = vsub.s32 1, %v386
  %v388 = vrot.slane %v379, %v387
  %v455 = vunpack.c.l.b16 %v315
  %v456 = vunpack.c.h.b16 %v315
  %v457 = vunpack.c.l.b16 %v316
  %v458 = vunpack.c.h.b16 %v316
  %v459 = vunpack.c.l.b16 %v317
  %v460 = vunpack.c.h.b16 %v317
  %v461 = vunpack.c.l.b16 %v318
  %v462 = vunpack.c.h.b16 %v318
  %v463 = vunpack.c.l.b16 %v319
  %v464 = vunpack.c.h.b16 %v319
  %v465 = vunpack.c.l.b16 %v320
  %v466 = vunpack.c.h.b16 %v320
  %v467 = vunpack.c.l.b16 %v321
  %v468 = vunpack.c.h.b16 %v321
  %v469 = vunpack.c.l.b16 %v322
  %v470 = vunpack.c.h.b16 %v322
  %v471 = vunpack.c.l.b16 %v323
  %v472 = vunpack.c.h.b16 %v323
  %v473 = vunpack.c.l.b16 %v324
  %v474 = vunpack.c.h.b16 %v324
  %v475 = vunpack.c.l.b16 %v325
  %v476 = vunpack.c.h.b16 %v325
  %v477 = vunpack.c.l.b16 %v326
  %v478 = vunpack.c.h.b16 %v326
  %v479 = vunpack.c.l.b16 %v327
  %v480 = vunpack.c.h.b16 %v327
  %v481 = vunpack.c.l.b16 %v328
  %v482 = vunpack.c.h.b16 %v328
  %v483 = vunpack.c.l.b16 %v329
  %v484 = vunpack.c.h.b16 %v329
  %v485 = vunpack.c.l.b16 %v330
  %v486 = vunpack.c.h.b16 %v330
  %v487 = vunpack.c.l.b16 %v331
  %v488 = vunpack.c.h.b16 %v331
  %v489 = vunpack.c.l.b16 %v332
  %v490 = vunpack.c.h.b16 %v332
  %v491 = vunpack.c.l.b16 %v333
  %v492 = vunpack.c.h.b16 %v333
  %v493 = vunpack.c.l.b16 %v334
  %v494 = vunpack.c.h.b16 %v334
  %v495 = vunpack.c.l.b16 %v335
  %v496 = vunpack.c.h.b16 %v335
  %v497 = vunpack.c.l.b16 %v336
  %v498 = vunpack.c.h.b16 %v336
  %v499 = vunpack.c.l.b16 %v337
  %v500 = vunpack.c.h.b16 %v337
  %v501 = vunpack.c.l.b16 %v338
  %v502 = vunpack.c.h.b16 %v338
  %v503 = vunpack.c.l.b16 %v339
  %v504 = vunpack.c.h.b16 %v339
  %v505 = vunpack.c.l.b16 %v340
  %v506 = vunpack.c.h.b16 %v340
  %v507 = vunpack.c.l.b16 %v341
  %v508 = vunpack.c.h.b16 %v341
  %v509 = vunpack.c.l.b16 %v342
  %v510 = vunpack.c.h.b16 %v342
  %v511 = vunpack.c.l.b16 %v343
  %v512 = vunpack.c.h.b16 %v343
  %v513 = vunpack.c.l.b16 %v344
  %v514 = vunpack.c.h.b16 %v344
  %v515 = vunpack.c.l.b16 %v345
  %v516 = vunpack.c.h.b16 %v345
  %v517 = vunpack.c.l.b16 %v346
  %v518 = vunpack.c.h.b16 %v346
  %v519 = vunpack.c.l.b16 %v347
  %v520 = vunpack.c.h.b16 %v347
  %v521 = vunpack.c.l.b16 %v348
  %v522 = vunpack.c.h.b16 %v348
  %v523 = vunpack.c.l.b16 %v349
  %v524 = vunpack.c.h.b16 %v349
  %v525 = vunpack.c.l.b16 %v350
  %v526 = vunpack.c.h.b16 %v350
  %v527 = vunpack.c.l.b16 %v351
  %v528 = vunpack.c.h.b16 %v351
  %v529 = vunpack.c.l.b16 %v352
  %v530 = vunpack.c.h.b16 %v352
  %v531 = vunpack.c.l.b16 %v353
  %v532 = vunpack.c.h.b16 %v353
  %v533 = vunpack.c.l.b16 %v354
  %v534 = vunpack.c.h.b16 %v354
  %v535 = vunpack.c.l.b16 %v355
  %v536 = vunpack.c.h.b16 %v355
  %v537 = vunpack.c.l.b16 %v356
  %v538 = vunpack.c.h.b16 %v356
  %v539 = vunpack.c.l.b16 %v357
  %v540 = vunpack.c.h.b16 %v357
  %v541 = vunpack.c.l.b16 %v358
  %v542 = vunpack.c.h.b16 %v358
  %v543 = vunpack.c.l.b16 %v359
  %v544 = vunpack.c.h.b16 %v359
  %v545 = vunpack.c.l.b16 %v360
  %v546 = vunpack.c.h.b16 %v360
  %v547 = vunpack.c.l.b16 %v361
  %v548 = vunpack.c.h.b16 %v361
  %v549 = vunpack.c.l.b16 %v362
  %v550 = vunpack.c.h.b16 %v362
  %v551 = vunpack.c.l.b16 %v363
  %v552 = vunpack.c.h.b16 %v363
  %v553 = vunpack.c.l.b16 %v364
  %v554 = vunpack.c.h.b16 %v364
  %v555 = vunpack.c.l.b16 %v365
  %v556 = vunpack.c.h.b16 %v365
  %v557 = vunpack.c.l.b16 %v366
  %v558 = vunpack.c.h.b16 %v366
  %v559 = vunpack.c.l.b16 %v367
  %v560 = vunpack.c.h.b16 %v367
  %v561 = vunpack.c.l.b16 %v368
  %v562 = vunpack.c.h.b16 %v368
  %v563 = vunpack.c.l.b16 %v369
  %v564 = vunpack.c.h.b16 %v369
  %v565 = vunpack.c.l.b16 %v370
  %v566 = vunpack.c.h.b16 %v370
  %v567 = vunpack.c.l.b16 %v371
  %v568 = vunpack.c.h.b16 %v371
  %v569 = vunpack.c.l.b16 %v372
  %v570 = vunpack.c.h.b16 %v372
  %v571 = vunpack.c.l.b16 %v373
  %v572 = vunpack.c.h.b16 %v373
  %v573 = vunpack.c.l.b16 %v374
  %v574 = vunpack.c.h.b16 %v374
  %v575 = vunpack.c.l.b16 %v375
  %v576 = vunpack.c.h.b16 %v375
  %v577 = vunpack.c.l.b16 %v376
  %v578 = vunpack.c.h.b16 %v376
  %v579 = vunpack.c.l.b16 %v377
  %v580 = vunpack.c.h.b16 %v377
  %v581 = vunpack.c.l.b16 %v378
  %v582 = vunpack.c.h.b16 %v378
  %v583 = vpack.c.b16 %v457, %v455
  %v584 = vpack.c.b16 %v458, %v456
  %v585 = vpack.c.b16 %v461, %v459
  %v586 = vpack.c.b16 %v462, %v460
  %v587 = vpack.c.b16 %v465, %v463
  %v588 = vpack.c.b16 %v466, %v464
  %v589 = vpack.c.b16 %v469, %v467
  %v590 = vpack.c.b16 %v470, %v468
  %v591 = vpack.c.b16 %v473, %v471
  %v592 = vpack.c.b16 %v474, %v472
  %v593 = vpack.c.b16 %v477, %v475
  %v594 = vpack.c.b16 %v478, %v476
  %v595 = vpack.c.b16 %v481, %v479
  %v596 = vpack.c.b16 %v482, %v480
  %v597 = vpack.c.b16 %v485, %v483
  %v598 = vpack.c.b16 %v486, %v484
  %v599 = vpack.c.b16 %v489, %v487
  %v600 = vpack.c.b16 %v490, %v488
  %v601 = vpack.c.b16 %v493, %v491
  %v602 = vpack.c.b16 %v494, %v492
  %v603 = vpack.c.b16 %v497, %v495
  %v604 = vpack.c.b16 %v498, %v496
  %v605 = vpack.c.b16 %v501, %v499
  %v606 = vpack.c.b16 %v502, %v500
  %v607 = vpack.c.b16 %v505, %v503
  %v608 = vpack.c.b16 %v506, %v504
  %v609 = vpack.c.b16 %v509, %v507
  %v610 = vpack.c.b16 %v510, %v508
  %v611 = vpack.c.b16 %v513, %v511
  %v612 = vpack.c.b16 %v514, %v512
  %v613 = vpack.c.b16 %v517, %v515
  %v614 = vpack.c.b16 %v518, %v516
  %v615 = vpack.c.b16 %v521, %v519
  %v616 = vpack.c.b16 %v522, %v520
  %v617 = vpack.c.b16 %v525, %v523
  %v618 = vpack.c.b16 %v526, %v524
  %v619 = vpack.c.b16 %v529, %v527
  %v620 = vpack.c.b16 %v530, %v528
  %v621 = vpack.c.b16 %v533, %v531
  %v622 = vpack.c.b16 %v534, %v532
  %v623 = vpack.c.b16 %v537, %v535
  %v624 = vpack.c.b16 %v538, %v536
  %v625 = vpack.c.b16 %v541, %v539
  %v626 = vpack.c.b16 %v542, %v540
  %v627 = vpack.c.b16 %v545, %v543
  %v628 = vpack.c.b16 %v546, %v544
  %v629 = vpack.c.b16 %v549, %v547
  %v630 = vpack.c.b16 %v550, %v548
  %v631 = vpack.c.b16 %v553, %v551
  %v632 = vpack.c.b16 %v554, %v552
  %v633 = vpack.c.b16 %v557, %v555
  %v634 = vpack.c.b16 %v558, %v556
  %v635 = vpack.c.b16 %v561, %v559
  %v636 = vpack.c.b16 %v562, %v560
  %v637 = vpack.c.b16 %v565, %v563
  %v638 = vpack.c.b16 %v566, %v564
  %v639 = vpack.c.b16 %v569, %v567
  %v640 = vpack.c.b16 %v570, %v568
  %v641 = vpack.c.b16 %v573, %v571
  %v642 = vpack.c.b16 %v574, %v572
  %v643 = vpack.c.b16 %v577, %v575
  %v644 = vpack.c.b16 %v578, %v576
  %v645 = vpack.c.b16 %v581, %v579
  %v646 = vpack.c.b16 %v582, %v580
  %711 = vmatprep.subr.bf16.mxu0 %v584
  %712 = vmatpush1.bf16.msra.mxu0 %v583
  %713 = vmatprep.subr.bf16.mxu0 %v586
  %714 = vmatpush1.bf16.msra.mxu0 %v585
  %715 = vmatprep.subr.bf16.mxu0 %v588
  %716 = vmatpush1.bf16.msra.mxu0 %v587
  %717 = vmatprep.subr.bf16.mxu0 %v590
  %718 = vmatpush1.bf16.msra.mxu0 %v589
  %719 = vmatprep.subr.bf16.mxu0 %v592
  %720 = vmatpush1.bf16.msra.mxu0 %v591
  %721 = vmatprep.subr.bf16.mxu0 %v594
  %722 = vmatpush1.bf16.msra.mxu0 %v593
  %723 = vmatprep.subr.bf16.mxu0 %v596
  %724 = vmatpush1.bf16.msra.mxu0 %v595
  %725 = vmatprep.subr.bf16.mxu0 %v598
  %726 = vmatpush1.bf16.msra.mxu0 %v597
  %727 = vmatprep.subr.bf16.mxu0 %v600
  %728 = vmatpush1.bf16.msra.mxu0 %v599
  %729 = vmatprep.subr.bf16.mxu0 %v602
  %730 = vmatpush1.bf16.msra.mxu0 %v601
  %731 = vmatprep.subr.bf16.mxu0 %v604
  %732 = vmatpush1.bf16.msra.mxu0 %v603
  %733 = vmatprep.subr.bf16.mxu0 %v606
  %734 = vmatpush1.bf16.msra.mxu0 %v605
  %735 = vmatprep.subr.bf16.mxu0 %v608
  %736 = vmatpush1.bf16.msra.mxu0 %v607
  %737 = vmatprep.subr.bf16.mxu0 %v610
  %738 = vmatpush1.bf16.msra.mxu0 %v609
  %739 = vmatprep.subr.bf16.mxu0 %v612
  %740 = vmatpush1.bf16.msra.mxu0 %v611
  %741 = vmatprep.subr.bf16.mxu0 %v614
  %742 = vmatpush1.bf16.msra.mxu0 %v613
  %743 = vmatprep.mubr.bf16.mxu0 %v308
  %744 = vmatmul.mubr.bf16.gmra.mrb[0].mxu0 %v307
  %v745 = vpop.f32.mrb[0].mxu0
  %v746 = vadd.f32 %v384, %v745
  %v747 = vpop.f32.mrb[0].mxu0
  %v748 = vadd.f32 %v388, %v747
  %v749 = vpop.f32.mrb[0].mxu0
  %v750 = vadd.f32 %v384, %v749
  %v751 = vpop.f32.mrb[0].mxu0
  %v752 = vadd.f32 %v388, %v751
  %753 = vmatprep.mubr.bf16.mxu0 %v312
  %754 = vmatmul.mubr.bf16.gmra.mrb[0].mxu0 %v311
  %v755 = vpop.f32.mrb[0].mxu0
  %v756 = vadd.f32 %v384, %v755
  %v757 = vpop.f32.mrb[0].mxu0
  %v758 = vadd.f32 %v388, %v757
  %v759 = vpop.f32.mrb[0].mxu0
  %v760 = vadd.f32 %v384, %v759
  %v761 = vpop.f32.mrb[0].mxu0
  %v762 = vadd.f32 %v388, %v761
  %763 = vdwg.mxu0
  %764 = vmatprep.subr.bf16.mxu0 %v616
  %765 = vmatpush1.bf16.msra.mxu0 %v615
  %766 = vmatprep.subr.bf16.mxu0 %v618
  %767 = vmatpush1.bf16.msra.mxu0 %v617
  %768 = vmatprep.subr.bf16.mxu0 %v620
  %769 = vmatpush1.bf16.msra.mxu0 %v619
  %770 = vmatprep.subr.bf16.mxu0 %v622
  %771 = vmatpush1.bf16.msra.mxu0 %v621
  %772 = vmatprep.subr.bf16.mxu0 %v624
  %773 = vmatpush1.bf16.msra.mxu0 %v623
  %774 = vmatprep.subr.bf16.mxu0 %v626
  %775 = vmatpush1.bf16.msra.mxu0 %v625
  %776 = vmatprep.subr.bf16.mxu0 %v628
  %777 = vmatpush1.bf16.msra.mxu0 %v627
  %778 = vmatprep.subr.bf16.mxu0 %v630
  %779 = vmatpush1.bf16.msra.mxu0 %v629
  %780 = vmatprep.subr.bf16.mxu0 %v632
  %781 = vmatpush1.bf16.msra.mxu0 %v631
  %782 = vmatprep.subr.bf16.mxu0 %v634
  %783 = vmatpush1.bf16.msra.mxu0 %v633
  %784 = vmatprep.subr.bf16.mxu0 %v636
  %785 = vmatpush1.bf16.msra.mxu0 %v635
  %786 = vmatprep.subr.bf16.mxu0 %v638
  %787 = vmatpush1.bf16.msra.mxu0 %v637
  %788 = vmatprep.subr.bf16.mxu0 %v640
  %789 = vmatpush1.bf16.msra.mxu0 %v639
  %790 = vmatprep.subr.bf16.mxu0 %v642
  %791 = vmatpush1.bf16.msra.mxu0 %v641
  %792 = vmatprep.subr.bf16.mxu0 %v644
  %793 = vmatpush1.bf16.msra.mxu0 %v643
  %794 = vmatprep.subr.bf16.mxu0 %v646
  %795 = vmatpush1.bf16.msra.mxu0 %v645
  %796 = vmatprep.mubr.bf16.mxu0 %v310
  %797 = vmatmul.mubr.bf16.gmra.mrb[0].mxu0 %v309
  %v798 = vpop.f32.mrb[0].mxu0
  %v799 = vadd.f32 %v746, %v798
  %v800 = vpop.f32.mrb[0].mxu0
  %v801 = vadd.f32 %v748, %v800
  %v802 = vpop.f32.mrb[0].mxu0
  %v803 = vadd.f32 %v750, %v802
  %v804 = vpop.f32.mrb[0].mxu0
  %v805 = vadd.f32 %v752, %v804
  %806 = vmatprep.mubr.bf16.mxu0 %v314
  %807 = vmatmul.mubr.bf16.gmra.mrb[0].mxu0 %v313
  %v808 = vpop.f32.mrb[0].mxu0
  %v809 = vadd.f32 %v756, %v808
  %v810 = vpop.f32.mrb[0].mxu0
  %v811 = vadd.f32 %v758, %v810
  %v812 = vpop.f32.mrb[0].mxu0
  %v813 = vadd.f32 %v760, %v812
  %v814 = vpop.f32.mrb[0].mxu0
  %v815 = vadd.f32 %v762, %v814
  %816 = vdwg.mxu0
  %817 = vset.pattern.permute.xlu0 2
  %818 = vperm.xlu0 %817, %v36
  %v819 = vpop.permute.xlu0 %818
  %821 = vset.pattern.permute.xlu0 2
  %822 = vperm.xlu0 %821, %v37
  %v823 = vpop.permute.xlu0 %822
  %825 = vset.pattern.permute.xlu0 2
  %826 = vperm.xlu0 %825, %v38
  %v827 = vpop.permute.xlu0 %826
  %829 = vset.pattern.permute.xlu0 2
  %830 = vperm.xlu0 %829, %v39
  %v831 = vpop.permute.xlu0 %830
  %v833 = vmul.f32 %v799, %v819
  %v834 = vmul.f32 %v801, %v819
  %v835 = vmul.f32 %v803, %v823
  %v836 = vmul.f32 %v805, %v823
  %v837 = vmul.f32 %v809, %v827
  %v838 = vmul.f32 %v811, %v827
  %v839 = vmul.f32 %v813, %v831
  %v840 = vmul.f32 %v815, %v831
  %841 = vset.pattern.permute.xlu0 3
  %842 = vperm.xlu0 %841, %v36
  %v843 = vpop.permute.xlu0 %842
  %845 = vset.pattern.permute.xlu0 3
  %846 = vperm.xlu0 %845, %v37
  %v847 = vpop.permute.xlu0 %846
  %849 = vset.pattern.permute.xlu0 3
  %850 = vperm.xlu0 %849, %v38
  %v851 = vpop.permute.xlu0 %850
  %853 = vset.pattern.permute.xlu0 3
  %854 = vperm.xlu0 %853, %v39
  %v855 = vpop.permute.xlu0 %854
  %v857 = vadd.f32 %v833, %v843
  %v858 = vadd.f32 %v834, %v843
  %v859 = vadd.f32 %v835, %v847
  %v860 = vadd.f32 %v836, %v847
  %v861 = vadd.f32 %v837, %v851
  %v862 = vadd.f32 %v838, %v851
  %v863 = vadd.f32 %v839, %v855
  %v864 = vadd.f32 %v840, %v855
  %v865 = vmax.f32 %v857, 0.0
  %v866 = vmax.f32 %v858, 0.0
  %v867 = vmax.f32 %v859, 0.0
  %v868 = vmax.f32 %v860, 0.0
  %v869 = vmax.f32 %v861, 0.0
  %v870 = vmax.f32 %v862, 0.0
  %v871 = vmax.f32 %v863, 0.0
  %v872 = vmax.f32 %v864, 0.0
  %v873 = vpack.c.bf16 %v867, %v865
  %v874 = vpack.c.bf16 %v868, %v866
  %v875 = vpack.c.bf16 %v871, %v869
  %v876 = vpack.c.bf16 %v872, %v870
  %v877 = vld [vmem:[%s6] sm:$0xf]
  %v878 = vld [vmem:[%s6 + $0x4] sm:$0xf]
  %v879 = vld [vmem:[%s6 + $0x8] sm:$0xf]
  %v880 = vld [vmem:[%s6 + $0xc] sm:$0xf]
  %v881 = vld [vmem:[%s6 + $0x10] sm:$0xf]
  %v882 = vld [vmem:[%s6 + $0x14] sm:$0xf]
  %v883 = vld [vmem:[%s6 + $0x18] sm:$0xf]
  %v884 = vld [vmem:[%s6 + $0x1c] sm:$0xf]
  %v885 = vld [vmem:[%s6 + $0x20] sm:$0xf]
  %v886 = vld [vmem:[%s6 + $0x24] sm:$0xf]
  %v887 = vld [vmem:[%s6 + $0x28] sm:$0xf]
  %v888 = vld [vmem:[%s6 + $0x2c] sm:$0xf]
  %v889 = vld [vmem:[%s6 + $0x30] sm:$0xf]
  %v890 = vld [vmem:[%s6 + $0x34] sm:$0xf]
  %v891 = vld [vmem:[%s6 + $0x38] sm:$0xf]
  %v892 = vld [vmem:[%s6 + $0x3c] sm:$0xf]
  %v893 = vld [vmem:[%s6 + $0x40] sm:$0xf]
  %v894 = vld [vmem:[%s6 + $0x44] sm:$0xf]
  %v895 = vld [vmem:[%s6 + $0x48] sm:$0xf]
  %v896 = vld [vmem:[%s6 + $0x4c] sm:$0xf]
  %v897 = vld [vmem:[%s6 + $0x50] sm:$0xf]
  %v898 = vld [vmem:[%s6 + $0x54] sm:$0xf]
  %v899 = vld [vmem:[%s6 + $0x58] sm:$0xf]
  %v900 = vld [vmem:[%s6 + $0x5c] sm:$0xf]
  %v901 = vld [vmem:[%s6 + $0x60] sm:$0xf]
  %v902 = vld [vmem:[%s6 + $0x64] sm:$0xf]
  %v903 = vld [vmem:[%s6 + $0x68] sm:$0xf]
  %v904 = vld [vmem:[%s6 + $0x6c] sm:$0xf]
  %v905 = vld [vmem:[%s6 + $0x70] sm:$0xf]
  %v906 = vld [vmem:[%s6 + $0x74] sm:$0xf]
  %v907 = vld [vmem:[%s6 + $0x78] sm:$0xf]
  %v908 = vld [vmem:[%s6 + $0x7c] sm:$0xf]
  %v909 = vld [vmem:[%s7] sm:$0x1]
  %v911 = vlaneseq
  %v912 = vshrl.u32 %v911, 7
  %v913 = vsub.s32 0, %v912
  %v914 = vrot.slane %v909, %v913
  %v948 = vunpack.c.l.b16 %v877
  %v949 = vunpack.c.l.b16 %v878
  %v950 = vunpack.c.l.b16 %v879
  %v951 = vunpack.c.l.b16 %v880
  %v952 = vunpack.c.l.b16 %v881
  %v953 = vunpack.c.l.b16 %v882
  %v954 = vunpack.c.l.b16 %v883
  %v955 = vunpack.c.l.b16 %v884
  %v956 = vunpack.c.l.b16 %v885
  %v957 = vunpack.c.l.b16 %v886
  %v958 = vunpack.c.l.b16 %v887
  %v959 = vunpack.c.l.b16 %v888
  %v960 = vunpack.c.l.b16 %v889
  %v961 = vunpack.c.l.b16 %v890
  %v962 = vunpack.c.l.b16 %v891
  %v963 = vunpack.c.l.b16 %v892
  %v964 = vunpack.c.l.b16 %v893
  %v965 = vunpack.c.l.b16 %v894
  %v966 = vunpack.c.l.b16 %v895
  %v967 = vunpack.c.l.b16 %v896
  %v968 = vunpack.c.l.b16 %v897
  %v969 = vunpack.c.l.b16 %v898
  %v970 = vunpack.c.l.b16 %v899
  %v971 = vunpack.c.l.b16 %v900
  %v972 = vunpack.c.l.b16 %v901
  %v973 = vunpack.c.l.b16 %v902
  %v974 = vunpack.c.l.b16 %v903
  %v975 = vunpack.c.l.b16 %v904
  %v976 = vunpack.c.l.b16 %v905
  %v977 = vunpack.c.l.b16 %v906
  %v978 = vunpack.c.l.b16 %v907
  %v979 = vunpack.c.l.b16 %v908
  %v980 = vpack.c.b16 %v949, %v948
  %v981 = vpack.c.b16 %v951, %v950
  %v982 = vpack.c.b16 %v953, %v952
  %v983 = vpack.c.b16 %v955, %v954
  %v984 = vpack.c.b16 %v957, %v956
  %v985 = vpack.c.b16 %v959, %v958
  %v986 = vpack.c.b16 %v961, %v960
  %v987 = vpack.c.b16 %v963, %v962
  %v988 = vpack.c.b16 %v965, %v964
  %v989 = vpack.c.b16 %v967, %v966
  %v990 = vpack.c.b16 %v969, %v968
  %v991 = vpack.c.b16 %v971, %v970
  %v992 = vpack.c.b16 %v973, %v972
  %v993 = vpack.c.b16 %v975, %v974
  %v994 = vpack.c.b16 %v977, %v976
  %v995 = vpack.c.b16 %v979, %v978
  %1012 = vmatprep.subr.bf16.mxu0 0
  %1013 = vmatpush1.bf16.msra.mxu0 %v980
  %1014 = vmatprep.subr.bf16.mxu0 0
  %1015 = vmatpush1.bf16.msra.mxu0 %v981
  %1016 = vmatprep.subr.bf16.mxu0 0
  %1017 = vmatpush1.bf16.msra.mxu0 %v982
  %1018 = vmatprep.subr.bf16.mxu0 0
  %1019 = vmatpush1.bf16.msra.mxu0 %v983
  %1020 = vmatprep.subr.bf16.mxu0 0
  %1021 = vmatpush1.bf16.msra.mxu0 %v984
  %1022 = vmatprep.subr.bf16.mxu0 0
  %1023 = vmatpush1.bf16.msra.mxu0 %v985
  %1024 = vmatprep.subr.bf16.mxu0 0
  %1025 = vmatpush1.bf16.msra.mxu0 %v986
  %1026 = vmatprep.subr.bf16.mxu0 0
  %1027 = vmatpush1.bf16.msra.mxu0 %v987
  %1028 = vmatprep.subr.bf16.mxu0 0
  %1029 = vmatpush1.bf16.msra.mxu0 %v988
  %1030 = vmatprep.subr.bf16.mxu0 0
  %1031 = vmatpush1.bf16.msra.mxu0 %v989
  %1032 = vmatprep.subr.bf16.mxu0 0
  %1033 = vmatpush1.bf16.msra.mxu0 %v990
  %1034 = vmatprep.subr.bf16.mxu0 0
  %1035 = vmatpush1.bf16.msra.mxu0 %v991
  %1036 = vmatprep.subr.bf16.mxu0 0
  %1037 = vmatpush1.bf16.msra.mxu0 %v992
  %1038 = vmatprep.subr.bf16.mxu0 0
  %1039 = vmatpush1.bf16.msra.mxu0 %v993
  %1040 = vmatprep.subr.bf16.mxu0 0
  %1041 = vmatpush1.bf16.msra.mxu0 %v994
  %1042 = vmatprep.subr.bf16.mxu0 0
  %1043 = vmatpush1.bf16.msra.mxu0 %v995
  %1044 = vmatprep.mubr.bf16.mxu0 %v874
  %1045 = vmatmul.mubr.bf16.gmra.mrb[0].mxu0 %v873
  %v1046 = vpop.f32.mrb[0].mxu0
  %v1047 = vadd.f32 %v914, %v1046
  %v1048 = vpop.f32.mrb[0].mxu0
  %v1049 = vpop.f32.mrb[0].mxu0
  %v1050 = vadd.f32 %v914, %v1049
  %v1051 = vpop.f32.mrb[0].mxu0
  %1052 = vmatprep.mubr.bf16.mxu0 %v876
  %1053 = vmatmul.mubr.bf16.gmra.mrb[0].mxu0 %v875
  %v1054 = vpop.f32.mrb[0].mxu0
  %v1055 = vadd.f32 %v914, %v1054
  %v1056 = vpop.f32.mrb[0].mxu0
  %v1057 = vpop.f32.mrb[0].mxu0
  %v1058 = vadd.f32 %v914, %v1057
  %v1059 = vpop.f32.mrb[0].mxu0
  %1060 = vdwg.mxu0
  %v1061 = vpack.c.bf16 %v1050, %v1047
  %v1062 = vpack.c.bf16 %v1058, %v1055
  %v1065 = vunpack.c.l.b16 %v1061
  %v1066 = vunpack.c.h.b16 %v1061
  %v1067 = vunpack.c.l.b16 %v1062
  %v1068 = vunpack.c.h.b16 %v1062
  %v1069 = vpack.c.b16 %v1065, %v1065
  %v1070 = vpack.c.b16 %v1066, %v1066
  %v1071 = vpack.c.b16 %v1067, %v1067
  %v1072 = vpack.c.b16 %v1068, %v1068
  %1077 = vst [vmem:[%s8] sm:$0xf] %v1069
  %1078 = vst [vmem:[%s8 + $0x4] sm:$0xf] %v1070
  %1079 = vst [vmem:[%s8 + $0x8] sm:$0xf] %v1071
  %1080 = vst [vmem:[%s8 + $0xc] sm:$0xf] %v1072
  // Predicated region
  $region34: #{decoder_mlp_forward.1} parent=0 // pred_check
    _
  $region35: #{decoder_mlp_forward.1} parent=0 // pred_check_branch
    %1082 = sbr.rel (0) target = $region37
  $region36: #{decoder_mlp_forward.1} parent=0 // pred_region
    _
  $region37: #{decoder_mlp_forward.1} parent=0 // pred_fallthru
    _
  // Predicated region
  $region38: #{decoder_mlp_forward.1} parent=0 // pred_check
    _
  $region39: #{decoder_mlp_forward.1} parent=0 // pred_check_branch
    %1084 = sbr.rel (0) target = $region41
  $region40: #{decoder_mlp_forward.1} parent=0 // pred_region
    _
  $region41: #{decoder_mlp_forward.1} parent=0 // pred_fallthru
    _

</llo_original>
